<compile_context>
chip_gen: v5e
topology: v5e:2x2
jax: 0.10.0
libtpu: 0.0.40
codegen_flags: <defaults>
</compile_context>

<pallas_src>
import functools

import jax
import jax.numpy as jnp
from jax.experimental import pallas as pl
from jax.experimental.pallas import tpu as pltpu

HIDDEN = 512


def _round_up(x, m):
    return ((x + m - 1) // m) * m


def _mlp_kernel(x_ref, w1_ref, b1_ref, w2_ref, b2_ref, out_ref):
    # fc1: MXU matmul, f32 accumulate; bias-add + ReLU on the VPU (free filler
    # under the MXU slot).
    h = jnp.dot(x_ref[...], w1_ref[...], preferred_element_type=jnp.float32)
    h = jnp.maximum(h + b1_ref[...], 0.0)
    # fc2: MXU matmul, f32 accumulate; bias-add on the VPU.
    y = jnp.dot(h.astype(w2_ref.dtype), w2_ref[...],
                preferred_element_type=jnp.float32)
    out_ref[...] = (y + b2_ref[...]).astype(out_ref.dtype)
    # TODO(synk): for v6e/v7x with large layers, cast x/w1/w2 operands to bf16
    # (keep f32 accumulation) to hit the bf16 MXU path and halve weight DMA.
    # TODO(synk): for very large D_in, add a K-reduction grid axis with a VMEM
    # f32 accumulator so w1 streams in tk-sized slabs instead of being fully
    # resident.


@functools.partial(jax.jit, static_argnames=("block_b",))
def neural_net_forward(x, w1, b1, w2, b2, *, block_b=128):
    """x: (B, D_in); w1: (D_in, 512); b1: (1, 512); w2: (512, D_out); b2: (1, D_out)."""
    B, D_in = x.shape
    D_out = w2.shape[1]

    # ---- padding for alignment / lane-dense stores -------------------------
    d_in_p = _round_up(D_in, 128)
    d_out_p = _round_up(D_out, 128)
    tb = min(block_b, _round_up(B, 8))          # batch tile, multiple of 8
    b_p = _round_up(B, tb)                       # padded batch
    n_tiles = b_p // tb

    x_p = jnp.pad(x, ((0, b_p - B), (0, d_in_p - D_in)))
    w1_p = jnp.pad(w1, ((0, d_in_p - D_in), (0, 0)))
    w2_p = jnp.pad(w2, ((0, 0), (0, d_out_p - D_out)))
    b2_p = jnp.pad(b2, ((0, 0), (0, d_out_p - D_out)))

    # ---- VMEM budget: resident weights + double-buffered x/out tiles -------
    f32 = 4
    footprint = f32 * (
        2 * tb * d_in_p            # x tile, double-buffered
        + 2 * d_in_p * HIDDEN      # w1 (budget 2 buffers conservatively)
        + 2 * HIDDEN               # b1
        + 2 * HIDDEN * d_out_p     # w2
        + 2 * d_out_p              # b2
        + 2 * tb * d_out_p         # out tile, double-buffered
        + tb * HIDDEN              # h intermediate
    )
    vmem_limit = int(min(100 * 2**20, max(32 * 2**20, int(footprint * 1.5))))

    out_p = pl.pallas_call(
        _mlp_kernel,
        out_shape=jax.ShapeDtypeStruct((b_p, d_out_p), x.dtype),
        grid_spec=pltpu.PrefetchScalarGridSpec(
            num_scalar_prefetch=0,
            grid=(n_tiles,),
            in_specs=[
                pl.BlockSpec((tb, d_in_p), lambda i: (i, 0)),        # x tile
                pl.BlockSpec((d_in_p, HIDDEN), lambda i: (0, 0)),    # w1 resident
                pl.BlockSpec((1, HIDDEN), lambda i: (0, 0)),         # b1 resident
                pl.BlockSpec((HIDDEN, d_out_p), lambda i: (0, 0)),   # w2 resident
                pl.BlockSpec((1, d_out_p), lambda i: (0, 0)),        # b2 resident
            ],
            out_specs=pl.BlockSpec((tb, d_out_p), lambda i: (i, 0)),
        ),
        compiler_params=pltpu.CompilerParams(
            dimension_semantics=("parallel",),
            vmem_limit_bytes=vmem_limit,
        ),
    )(x_p, w1_p, b1, w2_p, b2_p)

    return out_p[:B, :D_out]


def init_params(key, input_dims, output_dims):
    """Deterministic init mimicking torch.nn.Linear default (U[-1/sqrt(fan_in), 1/sqrt(fan_in)])."""
    k1, k2, k3, k4 = jax.random.split(key, 4)
    bound1 = 1.0 / jnp.sqrt(input_dims)
    bound2 = 1.0 / jnp.sqrt(HIDDEN)
    w1 = jax.random.uniform(k1, (input_dims, HIDDEN), jnp.float32, -bound1, bound1)
    b1 = jax.random.uniform(k2, (1, HIDDEN), jnp.float32, -bound1, bound1)
    w2 = jax.random.uniform(k3, (HIDDEN, output_dims), jnp.float32, -bound2, bound2)
    b2 = jax.random.uniform(k4, (1, output_dims), jnp.float32, -bound2, bound2)
    return w1, b1, w2, b2


if __name__ == "__main__":
    key = jax.random.PRNGKey(0)
    batch, input_dims, output_dims = 8, 64, 16

    kx, kp = jax.random.split(key)
    x = jax.random.normal(kx, (batch, input_dims), jnp.float32)
    w1, b1, w2, b2 = init_params(kp, input_dims, output_dims)

    out = neural_net_forward(x, w1, b1, w2, b2)
    out = jax.block_until_ready(out)

    # reference check in plain JAX
    ref = jnp.maximum(x @ w1 + b1, 0.0) @ w2 + b2
    assert out.shape == (batch, output_dims)
    assert jnp.allclose(out, ref, atol=1e-4, rtol=1e-4)
    print("KERNEL_OK")
</pallas_src>

<mosaic_0001>
module attributes {stable_mosaic.version = 11 : i64} {
  func.func @_mlp_kernel(%arg0: i32, %arg1: memref<8x128xf32, #tpu.memory_space<vmem>>, %arg2: memref<128x512xf32, #tpu.memory_space<vmem>>, %arg3: memref<1x512xf32, #tpu.memory_space<vmem>>, %arg4: memref<512x128xf32, #tpu.memory_space<vmem>>, %arg5: memref<1x128xf32, #tpu.memory_space<vmem>>, %arg6: memref<8x128xf32, #tpu.memory_space<vmem>>) attributes {dimension_semantics = [#tpu.dimension_semantics<parallel>], iteration_bounds = array<i64: 1>, scalar_prefetch = 0 : i64, scratch_operands = 0 : i64, tpu.core_type = #tpu.core_type<tc>, window_params = [{transform_indices = @transform_0, window_bounds = array<i64: 8, 128>}, {pipeline_mode = #tpu.pipeline_mode<synchronous>, transform_indices = @transform_1, window_bounds = array<i64: 128, 512>}, {pipeline_mode = #tpu.pipeline_mode<synchronous>, transform_indices = @transform_2, window_bounds = array<i64: 1, 512>}, {pipeline_mode = #tpu.pipeline_mode<synchronous>, transform_indices = @transform_3, window_bounds = array<i64: 512, 128>}, {pipeline_mode = #tpu.pipeline_mode<synchronous>, transform_indices = @transform_4, window_bounds = array<i64: 1, 128>}, {transform_indices = @transform_5, window_bounds = array<i64: 8, 128>}]} {
    %c0 = arith.constant 0 : index
    %c0_0 = arith.constant 0 : index
    %0 = vector.load %arg1[%c0, %c0_0] : memref<8x128xf32, #tpu.memory_space<vmem>>, vector<8x128xf32>
    %c0_1 = arith.constant 0 : index
    %c0_2 = arith.constant 0 : index
    %1 = vector.load %arg2[%c0_1, %c0_2] : memref<128x512xf32, #tpu.memory_space<vmem>>, vector<128x512xf32>
    %cst = arith.constant dense<0.000000e+00> : vector<8x512xf32>
    %2 = tpu.matmul %0, %1, %cst {dimension_numbers = #tpu.dot_dimension_numbers<[1], [0], [0], [1], [0, 0, 1, 1], [], []>} : vector<8x128xf32>, vector<128x512xf32>, vector<8x512xf32> -> vector<8x512xf32>
    %c0_3 = arith.constant 0 : index
    %c0_4 = arith.constant 0 : index
    %3 = vector.load %arg3[%c0_3, %c0_4] : memref<1x512xf32, #tpu.memory_space<vmem>>, vector<1x512xf32>
    %4 = vector.broadcast %3 : vector<1x512xf32> to vector<8x512xf32>
    %5 = arith.addf %2, %4 : vector<8x512xf32>
    %cst_5 = arith.constant 0.000000e+00 : f32
    %6 = vector.broadcast %cst_5 : f32 to vector<8x512xf32>
    %7 = arith.maximumf %5, %6 : vector<8x512xf32>
    %c0_6 = arith.constant 0 : index
    %c0_7 = arith.constant 0 : index
    %8 = vector.load %arg4[%c0_6, %c0_7] : memref<512x128xf32, #tpu.memory_space<vmem>>, vector<512x128xf32>
    %cst_8 = arith.constant dense<0.000000e+00> : vector<8x128xf32>
    %9 = tpu.matmul %7, %8, %cst_8 {dimension_numbers = #tpu.dot_dimension_numbers<[1], [0], [0], [1], [0, 0, 1, 1], [], []>} : vector<8x512xf32>, vector<512x128xf32>, vector<8x128xf32> -> vector<8x128xf32>
    %c0_9 = arith.constant 0 : index
    %c0_10 = arith.constant 0 : index
    %10 = vector.load %arg5[%c0_9, %c0_10] : memref<1x128xf32, #tpu.memory_space<vmem>>, vector<1x128xf32>
    %11 = vector.broadcast %10 : vector<1x128xf32> to vector<8x128xf32>
    %12 = arith.addf %9, %11 : vector<8x128xf32>
    %c0_11 = arith.constant 0 : index
    %c0_12 = arith.constant 0 : index
    %13 = vector.load %arg6[%c0_11, %c0_12] : memref<8x128xf32, #tpu.memory_space<vmem>>, vector<8x128xf32>
    tpu.vector_store %arg6[%c0_11, %c0_12], %12 {strides = array<i32>} : memref<8x128xf32, #tpu.memory_space<vmem>>, vector<8x128xf32>,
    return
  }
  func.func @transform_0(%arg0: i32) -> (i32, i32) {
    %c0_i32 = arith.constant 0 : i32
    %c0_i32_0 = arith.constant 0 : i32
    return %arg0, %c0_i32 : i32, i32
  }
  func.func @transform_1(%arg0: i32) -> (i32, i32) {
    %c0_i32 = arith.constant 0 : i32
    %c0_i32_0 = arith.constant 0 : i32
    %c0_i32_1 = arith.constant 0 : i32
    return %c0_i32, %c0_i32_0 : i32, i32
  }
  func.func @transform_2(%arg0: i32) -> (i32, i32) {
    %c0_i32 = arith.constant 0 : i32
    %c0_i32_0 = arith.constant 0 : i32
    %c0_i32_1 = arith.constant 0 : i32
    return %c0_i32, %c0_i32_0 : i32, i32
  }
  func.func @transform_3(%arg0: i32) -> (i32, i32) {
    %c0_i32 = arith.constant 0 : i32
    %c0_i32_0 = arith.constant 0 : i32
    %c0_i32_1 = arith.constant 0 : i32
    return %c0_i32, %c0_i32_0 : i32, i32
  }
  func.func @transform_4(%arg0: i32) -> (i32, i32) {
    %c0_i32 = arith.constant 0 : i32
    %c0_i32_0 = arith.constant 0 : i32
    %c0_i32_1 = arith.constant 0 : i32
    return %c0_i32, %c0_i32_0 : i32, i32
  }
  func.func @transform_5(%arg0: i32) -> (i32, i32) {
    %c0_i32 = arith.constant 0 : i32
    %c0_i32_0 = arith.constant 0 : i32
    return %arg0, %c0_i32 : i32, i32
  }
}

</mosaic_0001>

<llo_original>
// kernel: neural_net_forward.1
$region0: #{neural_net_forward.1}
  #allocation0 [shape = 'u32[]', space=smem, size = 0x4, offset = 0x4, fixed_abs, tag = 'smem constant byte address 0x4 - core index']
  #allocation1 [shape = 'u32[72,128]{1,0:T(1,128)}', space=vmem, size = 0x9000, scoped, tag = 'internal scratch']
  %s0 = inlined_call_operand.vmem [shape: f32[8,128], index: 0, kind: input, shape index: {}]
  %s1 = inlined_call_operand.vmem [shape: f32[128,512], index: 1, kind: input, shape index: {}]
  %s2 = inlined_call_operand.vmem [shape: f32[1,512], index: 2, kind: input, shape index: {}]
  %s3 = inlined_call_operand.vmem [shape: f32[512,128], index: 3, kind: input, shape index: {}]
  %s4 = inlined_call_operand.vmem [shape: f32[1,128], index: 4, kind: input, shape index: {}]
  %s5 = inlined_call_operand.hbm [shape: f32[8,128], index: 5, kind: output, shape index: {}]
  %s6 = sld [smem:[#allocation0]]
  $region30: #{neural_net_forward.1} parent=0
    _
  %s8 = ssub.s32 1, %s6
  %s9 = scalar_select 0, %s8, %s6
  $region1: #{neural_net_forward.1} parent=0
    #allocation2 [shape = 'u8[4096]{0}', space=vmem, size = 0x1000, scoped, tag = 'output window, operand 0, single buffered']
    #allocation3 [shape = 's32[1]{0}', space=sflag, size = 0x4, scoped, tag = 'scoped memory for neural_net_forward.1']
    %10 = vsyncpa [#allocation3], 0
    // Predicated region
    $region2: #{neural_net_forward.1} parent=1 // pred_check
      _
    $region3: #{neural_net_forward.1} parent=1 // pred_check_branch
      %12 = sbr.rel (0) target = $region5
    $region4: #{neural_net_forward.1} parent=1 // pred_region
      _
    $region5: #{neural_net_forward.1} parent=1 // pred_fallthru
      _
    // Predicated region
    $region6: #{neural_net_forward.1} parent=1 // pred_check
      _
    $region7: #{neural_net_forward.1} parent=1 // pred_check_branch
      %14 = sbr.rel (0) target = $region9
    $region8: #{neural_net_forward.1} parent=1 // pred_region
      _
    $region9: #{neural_net_forward.1} parent=1 // pred_fallthru
      _
    // Predicated region
    $region10: #{neural_net_forward.1} parent=1 // pred_check
      _
    $region11: #{neural_net_forward.1} parent=1 // pred_check_branch
      %16 = sbr.rel (0) target = $region13
    $region12: #{neural_net_forward.1} parent=1 // pred_region
      _
    $region13: #{neural_net_forward.1} parent=1 // pred_fallthru
      _
    // Predicated region
    $region14: #{neural_net_forward.1} parent=1 // pred_check
      _
    $region15: #{neural_net_forward.1} parent=1 // pred_check_branch
      %18 = sbr.rel (0) target = $region17
    $region16: #{neural_net_forward.1} parent=1 // pred_region
      _
    $region17: #{neural_net_forward.1} parent=1 // pred_fallthru
      _
    // Predicated region
    $region18: #{neural_net_forward.1} parent=1 // pred_check
      _
    $region19: #{neural_net_forward.1} parent=1 // pred_check_branch
      %20 = sbr.rel (0) target = $region21
    $region20: #{neural_net_forward.1} parent=1 // pred_region
      _
    $region21: #{neural_net_forward.1} parent=1 // pred_fallthru
      _
    %v21 = vld [vmem:[%s0] sm:$0xff]
    %v22 = vld [vmem:[%s1] sm:$0xff]
    %v23 = vld [vmem:[%s1 + $0x8] sm:$0xff]
    %v24 = vld [vmem:[%s1 + $0x10] sm:$0xff]
    %v25 = vld [vmem:[%s1 + $0x18] sm:$0xff]
    %v26 = vld [vmem:[%s1 + $0x20] sm:$0xff]
    %v27 = vld [vmem:[%s1 + $0x28] sm:$0xff]
    %v28 = vld [vmem:[%s1 + $0x30] sm:$0xff]
    %v29 = vld [vmem:[%s1 + $0x38] sm:$0xff]
    %v30 = vld [vmem:[%s1 + $0x40] sm:$0xff]
    %v31 = vld [vmem:[%s1 + $0x48] sm:$0xff]
    %v32 = vld [vmem:[%s1 + $0x50] sm:$0xff]
    %v33 = vld [vmem:[%s1 + $0x58] sm:$0xff]
    %v34 = vld [vmem:[%s1 + $0x60] sm:$0xff]
    %v35 = vld [vmem:[%s1 + $0x68] sm:$0xff]
    %v36 = vld [vmem:[%s1 + $0x70] sm:$0xff]
    %v37 = vld [vmem:[%s1 + $0x78] sm:$0xff]
    %v38 = vld [vmem:[%s1 + $0x80] sm:$0xff]
    %v39 = vld [vmem:[%s1 + $0x88] sm:$0xff]
    %v40 = vld [vmem:[%s1 + $0x90] sm:$0xff]
    %v41 = vld [vmem:[%s1 + $0x98] sm:$0xff]
    %v42 = vld [vmem:[%s1 + $0xa0] sm:$0xff]
    %v43 = vld [vmem:[%s1 + $0xa8] sm:$0xff]
    %v44 = vld [vmem:[%s1 + $0xb0] sm:$0xff]
    %v45 = vld [vmem:[%s1 + $0xb8] sm:$0xff]
    %v46 = vld [vmem:[%s1 + $0xc0] sm:$0xff]
    %v47 = vld [vmem:[%s1 + $0xc8] sm:$0xff]
    %v48 = vld [vmem:[%s1 + $0xd0] sm:$0xff]
    %v49 = vld [vmem:[%s1 + $0xd8] sm:$0xff]
    %v50 = vld [vmem:[%s1 + $0xe0] sm:$0xff]
    %v51 = vld [vmem:[%s1 + $0xe8] sm:$0xff]
    %v52 = vld [vmem:[%s1 + $0xf0] sm:$0xff]
    %v53 = vld [vmem:[%s1 + $0xf8] sm:$0xff]
    %v54 = vld [vmem:[%s1 + $0x100] sm:$0xff]
    %v55 = vld [vmem:[%s1 + $0x108] sm:$0xff]
    %v56 = vld [vmem:[%s1 + $0x110] sm:$0xff]
    %v57 = vld [vmem:[%s1 + $0x118] sm:$0xff]
    %v58 = vld [vmem:[%s1 + $0x120] sm:$0xff]
    %v59 = vld [vmem:[%s1 + $0x128] sm:$0xff]
    %v60 = vld [vmem:[%s1 + $0x130] sm:$0xff]
    %v61 = vld [vmem:[%s1 + $0x138] sm:$0xff]
    %v62 = vld [vmem:[%s1 + $0x140] sm:$0xff]
    %v63 = vld [vmem:[%s1 + $0x148] sm:$0xff]
    %v64 = vld [vmem:[%s1 + $0x150] sm:$0xff]
    %v65 = vld [vmem:[%s1 + $0x158] sm:$0xff]
    %v66 = vld [vmem:[%s1 + $0x160] sm:$0xff]
    %v67 = vld [vmem:[%s1 + $0x168] sm:$0xff]
    %v68 = vld [vmem:[%s1 + $0x170] sm:$0xff]
    %v69 = vld [vmem:[%s1 + $0x178] sm:$0xff]
    %v70 = vld [vmem:[%s1 + $0x180] sm:$0xff]
    %v71 = vld [vmem:[%s1 + $0x188] sm:$0xff]
    %v72 = vld [vmem:[%s1 + $0x190] sm:$0xff]
    %v73 = vld [vmem:[%s1 + $0x198] sm:$0xff]
    %v74 = vld [vmem:[%s1 + $0x1a0] sm:$0xff]
    %v75 = vld [vmem:[%s1 + $0x1a8] sm:$0xff]
    %v76 = vld [vmem:[%s1 + $0x1b0] sm:$0xff]
    %v77 = vld [vmem:[%s1 + $0x1b8] sm:$0xff]
    %v78 = vld [vmem:[%s1 + $0x1c0] sm:$0xff]
    %v79 = vld [vmem:[%s1 + $0x1c8] sm:$0xff]
    %v80 = vld [vmem:[%s1 + $0x1d0] sm:$0xff]
    %v81 = vld [vmem:[%s1 + $0x1d8] sm:$0xff]
    %v82 = vld [vmem:[%s1 + $0x1e0] sm:$0xff]
    %v83 = vld [vmem:[%s1 + $0x1e8] sm:$0xff]
    %v84 = vld [vmem:[%s1 + $0x1f0] sm:$0xff]
    %v85 = vld [vmem:[%s1 + $0x1f8] sm:$0xff]
    %v86 = vld [vmem:[%s2] sm:$0xf]
    %v88 = vperm.slane %v86, 0
    %v89 = vperm.slane %v86, 1
    %v90 = vperm.slane %v86, 2
    %v91 = vperm.slane %v86, 3
    %96 = vmatpush.msra.mxu0 %v82
    %97 = vmatpush.msra.mxu0 %v78
    %98 = vmatpush.msra.mxu0 %v74
    %99 = vmatpush.msra.mxu0 %v70
    %100 = vmatpush.msra.mxu0 %v66
    %101 = vmatpush.msra.mxu0 %v62
    %102 = vmatpush.msra.mxu0 %v58
    %103 = vmatpush.msra.mxu0 %v54
    %104 = vmatpush.msra.mxu0 %v50
    %105 = vmatpush.msra.mxu0 %v46
    %106 = vmatpush.msra.mxu0 %v42
    %107 = vmatpush.msra.mxu0 %v38
    %108 = vmatpush.msra.mxu0 %v34
    %109 = vmatpush.msra.mxu0 %v30
    %110 = vmatpush.msra.mxu0 %v26
    %111 = vmatpush.msra.mxu0 %v22
    %112 = vmatmul.f32.gmra.mxu0 %v21
    %v113 = vpop.f32.mrf.mxu0
    %v114 = vadd.f32 %v88, %v113
    %115 = vdwg.mxu0
    %116 = vmatpush.msra.mxu0 %v83
    %117 = vmatpush.msra.mxu0 %v79
    %118 = vmatpush.msra.mxu0 %v75
    %119 = vmatpush.msra.mxu0 %v71
    %120 = vmatpush.msra.mxu0 %v67
    %121 = vmatpush.msra.mxu0 %v63
    %122 = vmatpush.msra.mxu0 %v59
    %123 = vmatpush.msra.mxu0 %v55
    %124 = vmatpush.msra.mxu0 %v51
    %125 = vmatpush.msra.mxu0 %v47
    %126 = vmatpush.msra.mxu0 %v43
    %127 = vmatpush.msra.mxu0 %v39
    %128 = vmatpush.msra.mxu0 %v35
    %129 = vmatpush.msra.mxu0 %v31
    %130 = vmatpush.msra.mxu0 %v27
    %131 = vmatpush.msra.mxu0 %v23
    %132 = vmatmul.f32.gmra.mxu0 %v21
    %v133 = vpop.f32.mrf.mxu0
    %v134 = vadd.f32 %v89, %v133
    %135 = vdwg.mxu0
    %136 = vmatpush.msra.mxu0 %v84
    %137 = vmatpush.msra.mxu0 %v80
    %138 = vmatpush.msra.mxu0 %v76
    %139 = vmatpush.msra.mxu0 %v72
    %140 = vmatpush.msra.mxu0 %v68
    %141 = vmatpush.msra.mxu0 %v64
    %142 = vmatpush.msra.mxu0 %v60
    %143 = vmatpush.msra.mxu0 %v56
    %144 = vmatpush.msra.mxu0 %v52
    %145 = vmatpush.msra.mxu0 %v48
    %146 = vmatpush.msra.mxu0 %v44
    %147 = vmatpush.msra.mxu0 %v40
    %148 = vmatpush.msra.mxu0 %v36
    %149 = vmatpush.msra.mxu0 %v32
    %150 = vmatpush.msra.mxu0 %v28
    %151 = vmatpush.msra.mxu0 %v24
    %152 = vmatmul.f32.gmra.mxu0 %v21
    %v153 = vpop.f32.mrf.mxu0
    %v154 = vadd.f32 %v90, %v153
    %155 = vdwg.mxu0
    %156 = vmatpush.msra.mxu0 %v85
    %157 = vmatpush.msra.mxu0 %v81
    %158 = vmatpush.msra.mxu0 %v77
    %159 = vmatpush.msra.mxu0 %v73
    %160 = vmatpush.msra.mxu0 %v69
    %161 = vmatpush.msra.mxu0 %v65
    %162 = vmatpush.msra.mxu0 %v61
    %163 = vmatpush.msra.mxu0 %v57
    %164 = vmatpush.msra.mxu0 %v53
    %165 = vmatpush.msra.mxu0 %v49
    %166 = vmatpush.msra.mxu0 %v45
    %167 = vmatpush.msra.mxu0 %v41
    %168 = vmatpush.msra.mxu0 %v37
    %169 = vmatpush.msra.mxu0 %v33
    %170 = vmatpush.msra.mxu0 %v29
    %171 = vmatpush.msra.mxu0 %v25
    %172 = vmatmul.f32.gmra.mxu0 %v21
    %v173 = vpop.f32.mrf.mxu0
    %v174 = vadd.f32 %v91, %v173
    %175 = vdwg.mxu0
    %v176 = vmax.f32 %v114, 0.0
    %v177 = vmax.f32 %v134, 0.0
    %v178 = vmax.f32 %v154, 0.0
    %v179 = vmax.f32 %v174, 0.0
    %v180 = vld [vmem:[%s3] sm:$0xff]
    %v181 = vld [vmem:[%s3 + $0x8] sm:$0xff]
    %v182 = vld [vmem:[%s3 + $0x10] sm:$0xff]
    %v183 = vld [vmem:[%s3 + $0x18] sm:$0xff]
    %v184 = vld [vmem:[%s3 + $0x20] sm:$0xff]
    %v185 = vld [vmem:[%s3 + $0x28] sm:$0xff]
    %v186 = vld [vmem:[%s3 + $0x30] sm:$0xff]
    %v187 = vld [vmem:[%s3 + $0x38] sm:$0xff]
    %v188 = vld [vmem:[%s3 + $0x40] sm:$0xff]
    %v189 = vld [vmem:[%s3 + $0x48] sm:$0xff]
    %v190 = vld [vmem:[%s3 + $0x50] sm:$0xff]
    %v191 = vld [vmem:[%s3 + $0x58] sm:$0xff]
    %v192 = vld [vmem:[%s3 + $0x60] sm:$0xff]
    %v193 = vld [vmem:[%s3 + $0x68] sm:$0xff]
    %v194 = vld [vmem:[%s3 + $0x70] sm:$0xff]
    %v195 = vld [vmem:[%s3 + $0x78] sm:$0xff]
    %v196 = vld [vmem:[%s3 + $0x80] sm:$0xff]
    %v197 = vld [vmem:[%s3 + $0x88] sm:$0xff]
    %v198 = vld [vmem:[%s3 + $0x90] sm:$0xff]
    %v199 = vld [vmem:[%s3 + $0x98] sm:$0xff]
    %v200 = vld [vmem:[%s3 + $0xa0] sm:$0xff]
    %v201 = vld [vmem:[%s3 + $0xa8] sm:$0xff]
    %v202 = vld [vmem:[%s3 + $0xb0] sm:$0xff]
    %v203 = vld [vmem:[%s3 + $0xb8] sm:$0xff]
    %v204 = vld [vmem:[%s3 + $0xc0] sm:$0xff]
    %v205 = vld [vmem:[%s3 + $0xc8] sm:$0xff]
    %v206 = vld [vmem:[%s3 + $0xd0] sm:$0xff]
    %v207 = vld [vmem:[%s3 + $0xd8] sm:$0xff]
    %v208 = vld [vmem:[%s3 + $0xe0] sm:$0xff]
    %v209 = vld [vmem:[%s3 + $0xe8] sm:$0xff]
    %v210 = vld [vmem:[%s3 + $0xf0] sm:$0xff]
    %v211 = vld [vmem:[%s3 + $0xf8] sm:$0xff]
    %v212 = vld [vmem:[%s3 + $0x100] sm:$0xff]
    %v213 = vld [vmem:[%s3 + $0x108] sm:$0xff]
    %v214 = vld [vmem:[%s3 + $0x110] sm:$0xff]
    %v215 = vld [vmem:[%s3 + $0x118] sm:$0xff]
    %v216 = vld [vmem:[%s3 + $0x120] sm:$0xff]
    %v217 = vld [vmem:[%s3 + $0x128] sm:$0xff]
    %v218 = vld [vmem:[%s3 + $0x130] sm:$0xff]
    %v219 = vld [vmem:[%s3 + $0x138] sm:$0xff]
    %v220 = vld [vmem:[%s3 + $0x140] sm:$0xff]
    %v221 = vld [vmem:[%s3 + $0x148] sm:$0xff]
    %v222 = vld [vmem:[%s3 + $0x150] sm:$0xff]
    %v223 = vld [vmem:[%s3 + $0x158] sm:$0xff]
    %v224 = vld [vmem:[%s3 + $0x160] sm:$0xff]
    %v225 = vld [vmem:[%s3 + $0x168] sm:$0xff]
    %v226 = vld [vmem:[%s3 + $0x170] sm:$0xff]
    %v227 = vld [vmem:[%s3 + $0x178] sm:$0xff]
    %v228 = vld [vmem:[%s3 + $0x180] sm:$0xff]
    %v229 = vld [vmem:[%s3 + $0x188] sm:$0xff]
    %v230 = vld [vmem:[%s3 + $0x190] sm:$0xff]
    %v231 = vld [vmem:[%s3 + $0x198] sm:$0xff]
    %v232 = vld [vmem:[%s3 + $0x1a0] sm:$0xff]
    %v233 = vld [vmem:[%s3 + $0x1a8] sm:$0xff]
    %v234 = vld [vmem:[%s3 + $0x1b0] sm:$0xff]
    %v235 = vld [vmem:[%s3 + $0x1b8] sm:$0xff]
    %v236 = vld [vmem:[%s3 + $0x1c0] sm:$0xff]
    %v237 = vld [vmem:[%s3 + $0x1c8] sm:$0xff]
    %v238 = vld [vmem:[%s3 + $0x1d0] sm:$0xff]
    %v239 = vld [vmem:[%s3 + $0x1d8] sm:$0xff]
    %v240 = vld [vmem:[%s3 + $0x1e0] sm:$0xff]
    %v241 = vld [vmem:[%s3 + $0x1e8] sm:$0xff]
    %v242 = vld [vmem:[%s3 + $0x1f0] sm:$0xff]
    %v243 = vld [vmem:[%s3 + $0x1f8] sm:$0xff]
    %v244 = vld [vmem:[%s4] sm:$0x1]
    %v246 = vperm.slane %v244, 0
    %248 = vmatpush.msra.mxu0 %v195
    %249 = vmatpush.msra.mxu0 %v194
    %250 = vmatpush.msra.mxu0 %v193
    %251 = vmatpush.msra.mxu0 %v192
    %252 = vmatpush.msra.mxu0 %v191
    %253 = vmatpush.msra.mxu0 %v190
    %254 = vmatpush.msra.mxu0 %v189
    %255 = vmatpush.msra.mxu0 %v188
    %256 = vmatpush.msra.mxu0 %v187
    %257 = vmatpush.msra.mxu0 %v186
    %258 = vmatpush.msra.mxu0 %v185
    %259 = vmatpush.msra.mxu0 %v184
    %260 = vmatpush.msra.mxu0 %v183
    %261 = vmatpush.msra.mxu0 %v182
    %262 = vmatpush.msra.mxu0 %v181
    %263 = vmatpush.msra.mxu0 %v180
    %264 = vmatmul.f32.gmra.mxu0 %v176
    %v265 = vpop.f32.mrf.mxu0
    %v266 = vadd.f32 %v246, %v265
    %267 = vdwg.mxu0
    %268 = vmatpush.msra.mxu0 %v211
    %269 = vmatpush.msra.mxu0 %v210
    %270 = vmatpush.msra.mxu0 %v209
    %271 = vmatpush.msra.mxu0 %v208
    %272 = vmatpush.msra.mxu0 %v207
    %273 = vmatpush.msra.mxu0 %v206
    %274 = vmatpush.msra.mxu0 %v205
    %275 = vmatpush.msra.mxu0 %v204
    %276 = vmatpush.msra.mxu0 %v203
    %277 = vmatpush.msra.mxu0 %v202
    %278 = vmatpush.msra.mxu0 %v201
    %279 = vmatpush.msra.mxu0 %v200
    %280 = vmatpush.msra.mxu0 %v199
    %281 = vmatpush.msra.mxu0 %v198
    %282 = vmatpush.msra.mxu0 %v197
    %283 = vmatpush.msra.mxu0 %v196
    %284 = vmatmul.f32.gmra.mxu0 %v177
    %v285 = vpop.f32.mrf.mxu0
    %v286 = vadd.f32 %v266, %v285
    %287 = vdwg.mxu0
    %288 = vmatpush.msra.mxu0 %v227
    %289 = vmatpush.msra.mxu0 %v226
    %290 = vmatpush.msra.mxu0 %v225
    %291 = vmatpush.msra.mxu0 %v224
    %292 = vmatpush.msra.mxu0 %v223
    %293 = vmatpush.msra.mxu0 %v222
    %294 = vmatpush.msra.mxu0 %v221
    %295 = vmatpush.msra.mxu0 %v220
    %296 = vmatpush.msra.mxu0 %v219
    %297 = vmatpush.msra.mxu0 %v218
    %298 = vmatpush.msra.mxu0 %v217
    %299 = vmatpush.msra.mxu0 %v216
    %300 = vmatpush.msra.mxu0 %v215
    %301 = vmatpush.msra.mxu0 %v214
    %302 = vmatpush.msra.mxu0 %v213
    %303 = vmatpush.msra.mxu0 %v212
    %304 = vmatmul.f32.gmra.mxu0 %v178
    %v305 = vpop.f32.mrf.mxu0
    %v306 = vadd.f32 %v286, %v305
    %307 = vdwg.mxu0
    %308 = vmatpush.msra.mxu0 %v243
    %309 = vmatpush.msra.mxu0 %v242
    %310 = vmatpush.msra.mxu0 %v241
    %311 = vmatpush.msra.mxu0 %v240
    %312 = vmatpush.msra.mxu0 %v239
    %313 = vmatpush.msra.mxu0 %v238
    %314 = vmatpush.msra.mxu0 %v237
    %315 = vmatpush.msra.mxu0 %v236
    %316 = vmatpush.msra.mxu0 %v235
    %317 = vmatpush.msra.mxu0 %v234
    %318 = vmatpush.msra.mxu0 %v233
    %319 = vmatpush.msra.mxu0 %v232
    %320 = vmatpush.msra.mxu0 %v231
    %321 = vmatpush.msra.mxu0 %v230
    %322 = vmatpush.msra.mxu0 %v229
    %323 = vmatpush.msra.mxu0 %v228
    %324 = vmatmul.f32.gmra.mxu0 %v179
    %v325 = vpop.f32.mrf.mxu0
    %v326 = vadd.f32 %v306, %v325
    %327 = vdwg.mxu0
    %328 = vst [vmem:[#allocation2] sm:$0xff] %v326
    // Predicated region
    $region22: #{neural_net_forward.1} parent=1 // pred_check
      _
    $region23: #{neural_net_forward.1} parent=1 // pred_check_branch
      %330 = sbr.rel (0) target = $region25
    $region24: #{neural_net_forward.1} parent=1 // pred_region
      %332 = vsyncadd [#allocation3], 0
      %s334 = sshll.u32 [#allocation2], 4
      %s335 = int_to_ptr.vmem [resolvable:$true] %s334
      %s336 = sshll.u32 %s5, 4
      %s337 = int_to_ptr.hbm [resolvable:$true] %s336
      %339 = dma.vmem_to_hbm [thread:$0]  %s335, 128, %s337, [#allocation3]
    $region25: #{neural_net_forward.1} parent=1 // pred_fallthru
      _
    // Predicated region
    $region26: #{neural_net_forward.1} parent=1 // pred_check
      _
    $region27: #{neural_net_forward.1} parent=1 // pred_check_branch
      %341 = sbr.rel (0) target = $region29
    $region28: #{neural_net_forward.1} parent=1 // pred_region
      %343 = dma.done [#allocation3], 128
    $region29: #{neural_net_forward.1} parent=1 // pred_fallthru
      _
    %344 = vsyncpa [#allocation3], 1

</llo_original>
